<compile_context>
chip_gen: v7x
topology: tpu7x:2x2x1
jax: 0.10.0
libtpu: 0.0.40
codegen_flags: <defaults>
</compile_context>

<pallas_src>
import functools

import jax
import jax.numpy as jnp
from jax import lax
from jax.experimental import pallas as pl
from jax.experimental.pallas import tpu as pltpu


def _round_up(n, m):
    return ((n + m - 1) // m) * m


# Conservative per-input VMEM budget so a double-buffered input block stays
# well inside the scoped VMEM default even on v7x (64 MiB physical).
_VMEM_INPUT_BUDGET = 8 * 1024 * 1024


def _pred_stats_kernel(x_ref, out_ref):
    """Per-row max softmax probability + argmax over the class (lane) axis.

    x_ref:   (rows, C) float block.
    out_ref: (1, 2, rows) int32 block (lane-dense packed output):
             sublane 0 = f32 bits of max softmax prob, sublane 1 = argmax.
    """
    x = x_ref[...].astype(jnp.float32)                      # f32 (v5e: no bf16 VPU/EUP)
    m = jnp.max(x, axis=-1, keepdims=True)                  # (rows, 1)
    e = jnp.exp(x - m)                                      # EUP
    denom = jnp.sum(e, axis=-1, keepdims=True)              # (rows, 1)
    # max of softmax == exp(0) / sum(exp(x - max)) == 1 / denom
    maxprob = pl.reciprocal(denom, approx=True)             # EUP slot, ~free
    num_classes = x.shape[-1]
    idx = lax.broadcasted_iota(jnp.int32, x.shape, 1)
    # First-occurrence argmax (matches jnp.argmax); x == m is exact in f32.
    argmax = jnp.min(jnp.where(x == m, idx, num_classes),
                     axis=-1, keepdims=True).astype(jnp.int32)

    rows = x.shape[0]
    # (rows, 1) -> (1, rows): relayout so stores are wide along the lane axis
    # instead of lane-width-1 masked stores; one packed output slab per tile.
    mp_row = jnp.reshape(maxprob, (1, rows))
    ix_row = jnp.reshape(argmax, (1, rows))
    out_ref[0, 0:1, :] = pltpu.bitcast(mp_row, jnp.int32)   # f32 bits in i32 carrier
    out_ref[0, 1:2, :] = ix_row


@functools.partial(jax.jit, static_argnames=("row_tile",))
def pred_stats(preds, row_tile=2048):
    """preds: [B, T, C] -> (max softmax prob [B, T] f32, argmax [B, T] i32)."""
    B, T, C = preds.shape
    R = B * T
    x2d = preds.reshape(R, C)

    # Row tile: as large as possible (fewer grid steps), multiple of 8, capped
    # so a double-buffered f32 input block stays comfortably inside VMEM.
    max_rows_vmem = max(8, (_VMEM_INPUT_BUDGET // (2 * C * 4)) // 8 * 8)
    rt = min(row_tile, max_rows_vmem, _round_up(R, 8))
    rt = _round_up(rt, 8)
    R_pad = _round_up(R, rt)
    if R_pad != R:
        x2d = jnp.pad(x2d, ((0, R_pad - R), (0, 0)))
    G = R_pad // rt

    packed = pl.pallas_call(
        _pred_stats_kernel,
        out_shape=jax.ShapeDtypeStruct((G, 2, rt), jnp.int32),
        grid_spec=pltpu.PrefetchScalarGridSpec(
            num_scalar_prefetch=0,
            grid=(G,),
            in_specs=[pl.BlockSpec((rt, C), lambda g: (g, 0))],
            out_specs=pl.BlockSpec((1, 2, rt), lambda g: (g, 0, 0)),
        ),
        compiler_params=pltpu.CompilerParams(
            # Row tiles are independent -> shard across v7x's two TensorCores.
            dimension_semantics=("parallel",)),
    )(x2d)

    maxprob = lax.bitcast_convert_type(packed[:, 0, :], jnp.float32)
    maxprob = maxprob.reshape(R_pad)[:R]
    argmax = packed[:, 1, :].reshape(R_pad)[:R]
    return maxprob.reshape(B, T), argmax.reshape(B, T)


@jax.jit
def weighted_accuracy(acc_matrix, lengths):
    """acc_matrix: [D, M], lengths: [D] -> [M] length-weighted accuracies.

    Plain jnp: reduces ~D*M (~30) scalars, so a Pallas launch plus (8,128)
    tile padding would dominate by orders of magnitude; XLA fuses this free.
    """
    acc = acc_matrix.astype(jnp.float32)
    w = lengths.astype(jnp.float32)
    return (acc * w[:, None]).sum(axis=0) / w.sum()


if __name__ == "__main__":
    key = jax.random.PRNGKey(0)
    k1, k2 = jax.random.split(key)

    # Small shapes consistent with the forward:
    #   batch B=2, sequence T=8, num_classes C=96 (text_for_pred is filled
    #   with class id 95, implying >= 96 classes).
    B, T, C = 2, 8, 96
    preds = jax.random.normal(k1, (B, T, C), dtype=jnp.float32)

    # Glue corresponding to `text_for_pred = LongTensor(batch_size).fill_(95)`
    text_for_pred = jnp.full((B,), 95, dtype=jnp.int32)
    del text_for_pred  # not consumed by the numeric path

    max_prob, pred_index = pred_stats(preds)
    max_prob = jax.block_until_ready(max_prob)
    pred_index = jax.block_until_ready(pred_index)

    # Reference check (plain JAX). Tolerance loosened for approx reciprocal.
    ref_prob = jnp.max(jax.nn.softmax(preds, axis=2), axis=2)
    ref_idx = jnp.argmax(preds, axis=2).astype(jnp.int32)
    assert max_prob.shape == (B, T) and pred_index.shape == (B, T)
    assert jnp.allclose(max_prob, ref_prob, rtol=1e-2, atol=1e-3), "max prob mismatch"
    assert jnp.array_equal(pred_index, ref_idx), "argmax mismatch"

    # Aggregation over the 10 benchmark datasets x 3 methods
    # ('Share_pred', 'language', 'final'); deterministic synthetic accuracies.
    D, M = 10, 3
    acc_matrix = jax.random.uniform(k2, (D, M), dtype=jnp.float32) * 100.0
    lengths = jnp.arange(1, D + 1, dtype=jnp.float32) * 100.0

    total_acc = jax.block_until_ready(weighted_accuracy(acc_matrix, lengths))

    ref_total = (acc_matrix * lengths[:, None]).sum(0) / lengths.sum()
    assert jnp.allclose(total_acc, ref_total, atol=1e-4), "aggregation mismatch"

    print("KERNEL_OK")
</pallas_src>

<mosaic_0001>
module attributes {stable_mosaic.version = 11 : i64} {
  func.func @_pred_stats_kernel(%arg0: i32, %arg1: memref<16x96xf32, #tpu.memory_space<vmem>>, %arg2: memref<1x2x16xi32, #tpu.memory_space<vmem>>) attributes {dimension_semantics = [#tpu.dimension_semantics<parallel>], iteration_bounds = array<i64: 1>, scalar_prefetch = 0 : i64, scratch_operands = 0 : i64, tpu.core_type = #tpu.core_type<tc>, window_params = [{transform_indices = @transform_0, window_bounds = array<i64: 16, 96>}, {transform_indices = @transform_1, window_bounds = array<i64: 1, 2, 16>}]} {
    %c0 = arith.constant 0 : index
    %c0_0 = arith.constant 0 : index
    %0 = vector.load %arg1[%c0, %c0_0] : memref<16x96xf32, #tpu.memory_space<vmem>>, vector<16x96xf32>
    %cst = arith.constant dense<0xFF800000> : vector<16xf32>
    %1 = vector.multi_reduction <maximumf>, %0, %cst [1] : vector<16x96xf32> to vector<16xf32>
    %2 = vector.shape_cast %1 : vector<16xf32> to vector<16x1xf32>
    %3 = vector.broadcast %2 : vector<16x1xf32> to vector<16x96xf32>
    %4 = arith.subf %0, %3 : vector<16x96xf32>
    %5 = math.exp %4 : vector<16x96xf32>
    %cst_1 = arith.constant dense<0.000000e+00> : vector<16xf32>
    %6 = vector.multi_reduction <add>, %5, %cst_1 [1] : vector<16x96xf32> to vector<16xf32>
    %7 = vector.shape_cast %6 : vector<16xf32> to vector<16x1xf32>
    %8 = tpu.reciprocal %7 {approx = true} : vector<16x1xf32> -> vector<16x1xf32>
    %9 = tpu.iota {dimensions = array<i32: 1>} : vector<16x96xi32>
    %10 = vector.broadcast %2 : vector<16x1xf32> to vector<16x96xf32>
    %11 = arith.cmpf oeq, %0, %10 : vector<16x96xf32>
    %c96_i32 = arith.constant 96 : i32
    %12 = vector.broadcast %c96_i32 : i32 to vector<16x96xi32>
    %13 = arith.select %11, %9, %12 : vector<16x96xi1>, vector<16x96xi32>
    %cst_2 = arith.constant dense<2147483647> : vector<16xi32>
    %14 = vector.multi_reduction <minsi>, %13, %cst_2 [1] : vector<16x96xi32> to vector<16xi32>
    %15 = vector.shape_cast %14 : vector<16xi32> to vector<16x1xi32>
    %16 = vector.shape_cast %8 : vector<16x1xf32> to vector<1x16xf32>
    %17 = vector.shape_cast %15 : vector<16x1xi32> to vector<1x16xi32>
    %18 = tpu.bitcast %16 : vector<1x16xf32> -> vector<1x16xi32>
    %c0_3 = arith.constant 0 : index
    %c0_4 = arith.constant 0 : index
    %c0_5 = arith.constant 0 : index
    %19 = vector.load %arg2[%c0_3, %c0_4, %c0_5] : memref<1x2x16xi32, #tpu.memory_space<vmem>>, vector<1x1x16xi32>
    %20 = vector.shape_cast %19 : vector<1x1x16xi32> to vector<1x16xi32>
    %21 = vector.shape_cast %18 : vector<1x16xi32> to vector<1x1x16xi32>
    tpu.vector_store %arg2[%c0_3, %c0_4, %c0_5], %21 {strides = array<i32>} : memref<1x2x16xi32, #tpu.memory_space<vmem>>, vector<1x1x16xi32>,
    %c0_6 = arith.constant 0 : index
    %c1 = arith.constant 1 : index
    %c0_7 = arith.constant 0 : index
    %22 = vector.load %arg2[%c0_6, %c1, %c0_7] : memref<1x2x16xi32, #tpu.memory_space<vmem>>, vector<1x1x16xi32>
    %23 = vector.shape_cast %22 : vector<1x1x16xi32> to vector<1x16xi32>
    %24 = vector.shape_cast %17 : vector<1x16xi32> to vector<1x1x16xi32>
    tpu.vector_store %arg2[%c0_6, %c1, %c0_7], %24 {strides = array<i32>} : memref<1x2x16xi32, #tpu.memory_space<vmem>>, vector<1x1x16xi32>,
    return
  }
  func.func @transform_0(%arg0: i32) -> (i32, i32) {
    %c0_i32 = arith.constant 0 : i32
    %c0_i32_0 = arith.constant 0 : i32
    return %arg0, %c0_i32 : i32, i32
  }
  func.func @transform_1(%arg0: i32) -> (i32, i32, i32) {
    %c0_i32 = arith.constant 0 : i32
    %c0_i32_0 = arith.constant 0 : i32
    %c0_i32_1 = arith.constant 0 : i32
    return %arg0, %c0_i32, %c0_i32_0 : i32, i32, i32
  }
}

</mosaic_0001>

<llo_original>
// kernel: squeeze.3
$region0: #{squeeze.3}
  %s0 = inlined_call_operand.vmem [shape: s32[16], index: 0, kind: input, shape index: {}]
  %s1 = inlined_call_operand.hbm [shape: s32[2,8], index: 1, kind: output, shape index: {}]
  $region1: #{squeeze.3} parent=0
    #allocation0 [shape = 'u8[1024]{0}', space=vmem, size = 0x400, scoped, tag = 'operand span for operand 1']
    #allocation1 [shape = 's32[1]{0}', space=sflag, size = 0x4, scoped, tag = 'scoped memory for squeeze.3']
    #allocation2 [shape = 'u8[4096]{0}', space=vmem, size = 0x1000, scoped, tag = 'scoped mem for output reshape']
    #allocation3 [shape = 'u8[4096]{0}', space=vmem, size = 0x1000, scoped, tag = 'scoped mem for input reshape']
    %2 = vsyncpa [#allocation1], 0
    %s4 = sshllo.u32 0, 1
    %v5 = vld [vmem:[%s0] sm:%s4]
    %6 = vst [vmem:[#allocation3] sm:%s4] %v5
    %v7 = vld [vmem:[#allocation3] sm:$0x1]
    %vm8 = vcmask 64512
    %9 = vst.msk [vmem:[#allocation2] sm:$0x1] %vm8, %v7
    %v10 = vld [vmem:[#allocation3] sm:$0x1]
    %11 = vrot.lane.b32.xlu0 %v10, 120
    %v12 = vpop.permute.xlu0 %11
    %vm13 = vcmask 64512
    %s14 = scalar_lea.vmem [#allocation2], 1
    %15 = vst.msk [vmem:[%s14] sm:$0x1] %vm13, %v12
    %s17 = sshllo.u32 0, 2
    %v19 = vld [vmem:[#allocation2] sm:%s17]
    %s20 = sshllo.u32 0, 2
    %21 = vst [vmem:[#allocation0] sm:%s20] %v19
    %s23 = ssub.s32 32, 32
    %24 = vsyncadd [#allocation1], %s23
    %s26 = sshll.u32 [#allocation0], 4
    %s27 = int_to_ptr.vmem [resolvable:$true] %s26
    %29 = dma.vmem_to_hbm [thread:$0]  %s27, 32, %s1, [#allocation1]
    %30 = dma.done [#allocation1], 32
    %31 = vsyncpa [#allocation1], 1

// kernel: pred_stats.1
$region0: #{pred_stats.1}
  #allocation0 [shape = 'u32[]', space=smem, size = 0x4, offset = 0x4, fixed_abs, tag = 'smem constant byte address 0x4 - core index']
  #allocation1 [shape = 'u32[144,128]{1,0:T(1,128)}', space=vmem, size = 0x12000, scoped, tag = 'internal scratch']
  %s0 = inlined_call_operand.hbm [shape: f32[16,96], index: 0, kind: input, shape index: {}]
  %s1 = inlined_call_operand.vmem [shape: s32[1,2,16], index: 1, kind: output, shape index: {}]
  %s2 = sld [smem:[#allocation0]]
  $region18: #{pred_stats.1} parent=0
    _
  %s4 = ssub.s32 1, %s2
  %s5 = scalar_select 0, %s4, %s2
  $region1: #{pred_stats.1} parent=0
    #allocation2 [shape = 'u8[8192]{0}', space=vmem, size = 0x2000, scoped, tag = 'input window, operand 0, single buffered']
    #allocation3 [shape = 's32[1]{0}', space=sflag, size = 0x4, scoped, tag = 'scoped memory for pred_stats.1']
    %6 = vsyncpa [#allocation3], 0
    // Predicated region
    $region2: #{pred_stats.1} parent=1 // pred_check
      _
    $region3: #{pred_stats.1} parent=1 // pred_check_branch
      %8 = sbr.rel (0) target = $region5
    $region4: #{pred_stats.1} parent=1 // pred_region
      %s10 = ssub.s32 256, 256
      %11 = vsyncadd [#allocation3], %s10
      %s12 = sshll.u32 [#allocation2], 4
      %s13 = int_to_ptr.vmem [resolvable:$true] %s12
      %18 = dma.hbm_to_vmem [thread:$0]  %s0, 256, %s13, [#allocation3], 128, 128, 8
    $region5: #{pred_stats.1} parent=1 // pred_fallthru
      _
    // Predicated region
    $region6: #{pred_stats.1} parent=1 // pred_check
      _
    $region7: #{pred_stats.1} parent=1 // pred_check_branch
      %20 = sbr.rel (0) target = $region9
    $region8: #{pred_stats.1} parent=1 // pred_region
      %21 = dma.done [#allocation3], 256
    $region9: #{pred_stats.1} parent=1 // pred_fallthru
      _
    %v22 = vld [vmem:[#allocation2] sm:$0xff]
    %v23 = vld [vmem:[#allocation2 + $0x8] sm:$0xff]
    %vm24 = vcmask 785408
    %v25 = vsel %vm24, %v22, -inf
    %26 = vmax.xlane.f32.xlu0 %v25
    %v27 = vpop.xlane.xlu0 %26
    %v28 = vsel %vm24, %v23, -inf
    %29 = vmax.xlane.f32.xlu0 %v28
    %v30 = vpop.xlane.xlu0 %29
    %v31 = vsub.f32 %v22, %v27
    %v32 = vsub.f32 %v23, %v30
    %v33 = vmul.f32 %v31, 1.442695
    %v34 = vpow.pop %v33
    %v35 = vmul.f32 %v32, 1.442695
    %v36 = vpow.pop %v35
    %v37 = vsel %vm24, %v34, 0.0
    %38 = vadd.xlane.f32.xlu0 %v37
    %v39 = vpop.xlane.xlu0 %38
    %v40 = vsel %vm24, %v36, 0.0
    %41 = vadd.xlane.f32.xlu0 %v40
    %v42 = vpop.xlane.xlu0 %41
    %v43 = vrcp.pop %v39
    %v44 = vrcp.pop %v42
    %v45 = vlaneseq
    %v46 = vand.u32 %v45, 127
    %vm47 = vcmp.eq.f32.partialorder %v22, %v27
    %vm48 = vcmp.eq.f32.partialorder %v23, %v30
    %v49 = vsel %vm47, %v46, 96
    %v50 = vsel %vm48, %v46, 96
    %v51 = vsel %vm24, %v49, 2147483647
    %v52 = vand.u32 %v51, 65535
    %v53 = vshra.s32 %v51, 16
    %v54 = vcvt.s32.f32 %v52
    %v55 = vcvt.s32.f32 %v53
    %56 = vmin.xlane.f32.xlu0 %v55
    %v57 = vpop.xlane.xlu0 %56
    %vm58 = vcmp.eq.f32.partialorder %v55, %v57
    %v59 = vsel %vm58, %v54, inf
    %60 = vmin.xlane.f32.xlu0 %v59
    %v61 = vpop.xlane.xlu0 %60
    %v62 = vcvt.f32.s32 %v61
    %v63 = vcvt.f32.s32 %v57
    %v64 = vshll.u32 %v63, 16
    %v65 = vadd.s32 %v64, %v62
    %v66 = vsel %vm24, %v50, 2147483647
    %v67 = vand.u32 %v66, 65535
    %v68 = vshra.s32 %v66, 16
    %v69 = vcvt.s32.f32 %v67
    %v70 = vcvt.s32.f32 %v68
    %71 = vmin.xlane.f32.xlu0 %v70
    %v72 = vpop.xlane.xlu0 %71
    %vm73 = vcmp.eq.f32.partialorder %v70, %v72
    %v74 = vsel %vm73, %v69, inf
    %75 = vmin.xlane.f32.xlu0 %v74
    %v76 = vpop.xlane.xlu0 %75
    %v77 = vcvt.f32.s32 %v76
    %v78 = vcvt.f32.s32 %v72
    %v79 = vshll.u32 %v78, 16
    %v80 = vadd.s32 %v79, %v77
    %v83 = vlaneseq
    %v84 = vshrl.u32 %v83, 7
    %v85 = vsub.s32 %v46, %v84
    %v86 = vrot.slane %v43, %v85
    %v87 = vadd.s32 %v46, 4294967288
    %v88 = vlaneseq
    %v89 = vshrl.u32 %v88, 7
    %v90 = vsub.s32 %v87, %v89
    %v91 = vrot.slane %v44, %v90
    %vm92 = vcmask 130112
    %v93 = vsel %vm92, %v91, %v86
    %vm94 = vcmask 122880
    %95 = vst.msk [vmem:[%s1] sm:$0x1] %vm94, %v93
    %v96 = vlaneseq
    %v97 = vshrl.u32 %v96, 7
    %v98 = vsub.s32 %v46, %v97
    %v99 = vrot.slane %v65, %v98
    %v100 = vlaneseq
    %v101 = vshrl.u32 %v100, 7
    %v102 = vsub.s32 %v87, %v101
    %v103 = vrot.slane %v80, %v102
    %v104 = vsel %vm92, %v103, %v99
    %105 = vst.msk [vmem:[%s1 + $0x1] sm:$0x1] %vm94, %v104
    // Predicated region
    $region10: #{pred_stats.1} parent=1 // pred_check
      _
    $region11: #{pred_stats.1} parent=1 // pred_check_branch
      %107 = sbr.rel (0) target = $region13
    $region12: #{pred_stats.1} parent=1 // pred_region
      _
    $region13: #{pred_stats.1} parent=1 // pred_fallthru
      _
    // Predicated region
    $region14: #{pred_stats.1} parent=1 // pred_check
      _
    $region15: #{pred_stats.1} parent=1 // pred_check_branch
      %109 = sbr.rel (0) target = $region17
    $region16: #{pred_stats.1} parent=1 // pred_region
      _
    $region17: #{pred_stats.1} parent=1 // pred_fallthru
      _
    %110 = vsyncpa [#allocation3], 1

</llo_original>
